<compile_context>
chip_gen: v6e
topology: v6e:2x2x1
jax: 0.10.0
libtpu: 0.0.40
codegen_flags: <defaults>
</compile_context>

<pallas_src>
import numpy as np
import jax
import jax.numpy as jnp
from jax.experimental import pallas as pl
from jax.experimental.pallas import tpu as pltpu


def _round_up(x, m):
    return (x + m - 1) // m * m


def _block_diag(blocks):
    """blocks [J, a, b] -> block-diagonal [J*a, J*b]."""
    J, a, b = blocks.shape
    eye = jnp.eye(J, dtype=blocks.dtype)
    return jnp.einsum("jpq,jk->jpkq", blocks, eye).reshape(J * a, J * b)


def _embed_split_kernel(x_ref, w1_ref, b1_ref, w2_ref, b2_ref, o_ref):
    # x_ref:  [Bb, J*4]            (fused [input | validity] per joint)
    # w1_ref: [J*4, latent]        b1_ref: [1, latent]
    # w2_ref: [L, latent, latent]  b2_ref: [L, 1, latent]
    # o_ref:  [Bb, latent]
    wdt = w1_ref.dtype  # bf16 MXU operands by default; accumulation is always f32
    prec = jax.lax.Precision.HIGHEST if wdt == jnp.float32 else None
    x = x_ref[...].astype(wdt)
    h = jnp.dot(x, w1_ref[...], preferred_element_type=jnp.float32, precision=prec)
    h = h + b1_ref[...].astype(jnp.float32)
    num_layers = w2_ref.shape[0]
    for l in range(num_layers):  # static unroll over (SiLU, Linear) blocks
        h = h * jax.nn.sigmoid(h)  # SiLU in f32 (EUP slot)
        h = jnp.dot(h.astype(wdt), w2_ref[l], preferred_element_type=jnp.float32,
                    precision=prec)
        h = h + b2_ref[l].astype(jnp.float32)
    o_ref[...] = h.astype(o_ref.dtype)


def _run_split_mlp_blockdiag(xv, w1, b1, w2, b2, *, out_dtype=jnp.float32,
                             b_blk_max=2048):
    """xv [B, J*4] -> [B, latent] via block-diagonal dense MLP."""
    B, K = xv.shape
    latent = w1.shape[1]
    L = w2.shape[0]

    # Batch tiling:
    #  * big tiles (up to b_blk_max rows) amortize the ~0.35 us fixed per-grid-step cost,
    #  * >= 2 grid steps whenever B >= 16 so "parallel" can shard across v7x's 2 TCs,
    #  * no pad / slice: grid = cdiv(B, B_blk); Pallas clips the ragged last output block
    #    and rows are independent, so garbage rows in the final input tile never touch
    #    valid output rows.
    if B < 16:
        B_blk = B                      # single tile; block == full dim is always legal
    else:
        B_blk = min(b_blk_max, _round_up(pl.cdiv(B, 2), 8))
    grid = (pl.cdiv(B, B_blk),)

    # Weights have constant index_maps (fetched once, VMEM-resident). For large configs
    # single-buffer them so they don't burn 2x VMEM (v7x: 64 MiB phys / 32 MiB scoped).
    weight_bytes = sum(int(a.size) * a.dtype.itemsize for a in (w1, b1, w2, b2))
    big_weights = weight_bytes > (4 << 20)

    def w_spec(shape, index_map):
        if big_weights:
            return pl.BlockSpec(shape, index_map, pipeline_mode=pl.Buffered(1))
        return pl.BlockSpec(shape, index_map)

    return pl.pallas_call(
        _embed_split_kernel,
        out_shape=jax.ShapeDtypeStruct((B, latent), out_dtype),
        grid_spec=pltpu.PrefetchScalarGridSpec(
            num_scalar_prefetch=0,
            grid=grid,
            in_specs=[
                pl.BlockSpec((B_blk, K), lambda i: (i, 0)),            # fused input tile
                w_spec((K, latent), lambda i: (0, 0)),                 # W1 (resident)
                w_spec((1, latent), lambda i: (0, 0)),                 # b1
                w_spec((L, latent, latent), lambda i: (0, 0, 0)),      # W2 blocks
                w_spec((L, 1, latent), lambda i: (0, 0, 0)),           # b2
            ],
            out_specs=pl.BlockSpec((B_blk, latent), lambda i: (i, 0)),
        ),
        compiler_params=pltpu.CompilerParams(dimension_semantics=("parallel",)),
    )(xv, w1, b1, w2, b2)


class EmbedTargetLocSplit:
    """JAX/Pallas port of the PyTorch EmbedTargetLocSplit module."""

    def __init__(self, all_goal_joint_names, latent_dim, num_layers=1, *, key,
                 mxu_dtype=jnp.bfloat16, out_dtype=jnp.float32):
        self.extended_goal_joint_names = list(all_goal_joint_names) + ["traj", "heading"]
        self.name_to_idx = {n: i for i, n in enumerate(self.extended_goal_joint_names)}
        self.target_cond_dim = 4
        self.latent_dim = latent_dim
        J = len(self.extended_goal_joint_names)
        assert latent_dim % J == 0
        self.splited_dim = latent_dim // J
        S = self.splited_dim
        self.num_layers = num_layers
        self.mxu_dtype = mxu_dtype
        self.out_dtype = out_dtype

        # Deterministic init (same shapes as nn.Linear(4,S) / nn.Linear(S,S) per joint,
        # weights stored already transposed for x @ W).
        k1, k2, k3, k4 = jax.random.split(key, 4)
        s1 = 1.0 / np.sqrt(self.target_cond_dim)
        s2 = 1.0 / np.sqrt(S)
        self.w1 = jax.random.uniform(k1, (J, self.target_cond_dim, S), jnp.float32, -s1, s1)
        self.b1 = jax.random.uniform(k2, (J, S), jnp.float32, -s1, s1)
        self.w2 = jax.random.uniform(k3, (num_layers, J, S, S), jnp.float32, -s2, s2)
        self.b2 = jax.random.uniform(k4, (num_layers, J, S), jnp.float32, -s2, s2)

        # Block-diagonal dense weights built once. bf16 MXU operands keep the matmul
        # single-pass on every generation (f32 is multi-pass, and block-diag already
        # inflates FLOPs by J); accumulation stays f32 inside the kernel.
        self.W1_blk = _block_diag(self.w1).astype(mxu_dtype)                 # [J*4, latent]
        self.b1_flat = self.b1.reshape(1, latent_dim).astype(jnp.float32)    # [1, latent]
        self.W2_blk = jnp.stack(
            [_block_diag(self.w2[l]) for l in range(num_layers)]
        ).astype(mxu_dtype)                                                  # [L, latent, latent]
        self.b2_flat = self.b2.reshape(num_layers, 1, latent_dim).astype(jnp.float32)

    def _build_validity(self, B, J, target_joint_names, target_heading):
        # TODO(synk): the per-sample string/list lookup has no JAX/Pallas equivalent; it
        # stays as host-side glue producing a [B, J] 0/1 mask (vectorized numpy scatter,
        # no per-element Python assignments).
        rows, cols = [], []
        h_idx = self.name_to_idx["heading"]
        for b, names in enumerate(target_joint_names):
            idxs = [self.name_to_idx[str(n)] for n in np.asarray(names).tolist()]
            if target_heading[b]:
                idxs.append(h_idx)
            rows.extend([b] * len(idxs))
            cols.extend(idxs)
        validity = np.zeros((B, J), dtype=np.float32)
        if rows:
            validity[np.asarray(rows), np.asarray(cols)] = 1.0
        return validity

    def __call__(self, input, target_joint_names, target_heading):
        B, J, C = input.shape
        assert J == len(self.extended_goal_joint_names) and C == 3
        validity = jnp.asarray(
            self._build_validity(B, J, target_joint_names, target_heading), input.dtype
        )                                                         # [B, J]
        # torch.cat([input, validity[..., None]], -1) -> [B, J, 4]; flatten to the fused
        # [B, J*4] layout consumed by the single block-diagonal first-layer dot.
        mlp_input = jnp.concatenate([input, validity[..., None]], axis=-1).reshape(B, J * 4)
        # Output is already [B, latent_dim] == PyTorch cat-over-joints layout.
        return _run_split_mlp_blockdiag(
            mlp_input, self.W1_blk, self.b1_flat, self.W2_blk, self.b2_flat,
            out_dtype=self.out_dtype,
        )

    # Pure-JAX per-joint reference (same math as the PyTorch module) for verification.
    def reference(self, input, target_joint_names, target_heading):
        B, J, _ = input.shape
        validity = jnp.asarray(
            self._build_validity(B, J, target_joint_names, target_heading), input.dtype
        )[..., None]                                              # [B, J, 1]
        x = jnp.concatenate([input, validity], axis=-1)           # [B, J, 4]
        hi = jax.lax.Precision.HIGHEST
        h = jnp.einsum("bjc,jcs->bjs", x, self.w1, precision=hi) + self.b1[None]
        for l in range(self.num_layers):
            h = h * jax.nn.sigmoid(h)
            h = jnp.einsum("bjs,jst->bjt", h, self.w2[l], precision=hi) + self.b2[l][None]
        return h.reshape(B, self.latent_dim)


if __name__ == "__main__":
    key = jax.random.PRNGKey(0)
    all_goal_joint_names = ["pelvis", "head", "left_wrist", "right_wrist",
                            "left_foot", "right_foot"]
    latent_dim = 64          # J = 8 joints -> splited_dim = 8
    B = 2
    J = len(all_goal_joint_names) + 2

    x = jax.random.normal(jax.random.PRNGKey(1), (B, J, 3), jnp.float32)
    target_joint_names = [
        np.array(["pelvis", "head"]),
        np.array(["left_wrist", "traj"]),
    ]
    target_heading = [True, False]

    # f32-MXU module: bit-faithful check against the pure-JAX per-joint reference.
    mod_f32 = EmbedTargetLocSplit(all_goal_joint_names, latent_dim, num_layers=1,
                                  key=key, mxu_dtype=jnp.float32)
    out_f32 = jax.block_until_ready(mod_f32(x, target_joint_names, target_heading))
    ref = mod_f32.reference(x, target_joint_names, target_heading)
    assert out_f32.shape == (B, latent_dim), out_f32.shape
    np.testing.assert_allclose(np.asarray(out_f32), np.asarray(ref), rtol=1e-5, atol=1e-5)

    # Default bf16-MXU module (f32 accumulation + f32 output): looser tolerance.
    mod_bf16 = EmbedTargetLocSplit(all_goal_joint_names, latent_dim, num_layers=1, key=key)
    out_bf16 = jax.block_until_ready(mod_bf16(x, target_joint_names, target_heading))
    np.testing.assert_allclose(np.asarray(out_bf16), np.asarray(ref), rtol=2e-2, atol=2e-2)

    # Exercise the multi-step ragged grid path (B=20 -> 2 grid steps, last block partial).
    B2 = 20
    x2 = jax.random.normal(jax.random.PRNGKey(2), (B2, J, 3), jnp.float32)
    tjn2 = [np.array(["pelvis"])] * B2
    th2 = [(i % 2 == 0) for i in range(B2)]
    out2 = jax.block_until_ready(mod_f32(x2, tjn2, th2))
    ref2 = mod_f32.reference(x2, tjn2, th2)
    np.testing.assert_allclose(np.asarray(out2), np.asarray(ref2), rtol=1e-5, atol=1e-5)

    print("KERNEL_OK")
</pallas_src>

<mosaic_0001>
module attributes {stable_mosaic.version = 11 : i64} {
  func.func @_embed_split_kernel(%arg0: i32, %arg1: memref<2x32xf32, #tpu.memory_space<vmem>>, %arg2: memref<32x64xf32, #tpu.memory_space<vmem>>, %arg3: memref<1x64xf32, #tpu.memory_space<vmem>>, %arg4: memref<1x64x64xf32, #tpu.memory_space<vmem>>, %arg5: memref<1x1x64xf32, #tpu.memory_space<vmem>>, %arg6: memref<2x64xf32, #tpu.memory_space<vmem>>) attributes {dimension_semantics = [#tpu.dimension_semantics<parallel>], iteration_bounds = array<i64: 1>, scalar_prefetch = 0 : i64, scratch_operands = 0 : i64, tpu.core_type = #tpu.core_type<tc>, window_params = [{transform_indices = @transform_0, window_bounds = array<i64: 2, 32>}, {pipeline_mode = #tpu.pipeline_mode<synchronous>, transform_indices = @transform_1, window_bounds = array<i64: 32, 64>}, {pipeline_mode = #tpu.pipeline_mode<synchronous>, transform_indices = @transform_2, window_bounds = array<i64: 1, 64>}, {pipeline_mode = #tpu.pipeline_mode<synchronous>, transform_indices = @transform_3, window_bounds = array<i64: 1, 64, 64>}, {pipeline_mode = #tpu.pipeline_mode<synchronous>, transform_indices = @transform_4, window_bounds = array<i64: 1, 1, 64>}, {transform_indices = @transform_5, window_bounds = array<i64: 2, 64>}]} {
    %c0 = arith.constant 0 : index
    %c0_0 = arith.constant 0 : index
    %0 = vector.load %arg1[%c0, %c0_0] : memref<2x32xf32, #tpu.memory_space<vmem>>, vector<2x32xf32>
    %c0_1 = arith.constant 0 : index
    %c0_2 = arith.constant 0 : index
    %1 = vector.load %arg2[%c0_1, %c0_2] : memref<32x64xf32, #tpu.memory_space<vmem>>, vector<32x64xf32>
    %cst = arith.constant dense<0.000000e+00> : vector<2x64xf32>
    %2 = tpu.matmul %0, %1, %cst {dimension_numbers = #tpu.dot_dimension_numbers<[1], [0], [0], [1], [0, 0, 1, 1], [], []>, precision = #tpu.contract_precision<fp32>} : vector<2x32xf32>, vector<32x64xf32>, vector<2x64xf32> -> vector<2x64xf32>
    %c0_3 = arith.constant 0 : index
    %c0_4 = arith.constant 0 : index
    %3 = vector.load %arg3[%c0_3, %c0_4] : memref<1x64xf32, #tpu.memory_space<vmem>>, vector<1x64xf32>
    %4 = vector.broadcast %3 : vector<1x64xf32> to vector<2x64xf32>
    %5 = arith.addf %2, %4 : vector<2x64xf32>
    %6 = arith.negf %5 : vector<2x64xf32>
    %7 = math.exp %6 : vector<2x64xf32>
    %cst_5 = arith.constant 1.000000e+00 : f32
    %8 = vector.broadcast %cst_5 : f32 to vector<2x64xf32>
    %9 = arith.addf %8, %7 : vector<2x64xf32>
    %10 = arith.divf %8, %9 : vector<2x64xf32>
    %11 = arith.mulf %5, %10 : vector<2x64xf32>
    %c0_6 = arith.constant 0 : index
    %c0_7 = arith.constant 0 : index
    %c0_8 = arith.constant 0 : index
    %12 = vector.load %arg4[%c0_6, %c0_7, %c0_8] : memref<1x64x64xf32, #tpu.memory_space<vmem>>, vector<1x64x64xf32>
    %13 = vector.shape_cast %12 : vector<1x64x64xf32> to vector<64x64xf32>
    %cst_9 = arith.constant dense<0.000000e+00> : vector<2x64xf32>
    %14 = tpu.matmul %11, %13, %cst_9 {dimension_numbers = #tpu.dot_dimension_numbers<[1], [0], [0], [1], [0, 0, 1, 1], [], []>, precision = #tpu.contract_precision<fp32>} : vector<2x64xf32>, vector<64x64xf32>, vector<2x64xf32> -> vector<2x64xf32>
    %c0_10 = arith.constant 0 : index
    %c0_11 = arith.constant 0 : index
    %c0_12 = arith.constant 0 : index
    %15 = vector.load %arg5[%c0_10, %c0_11, %c0_12] : memref<1x1x64xf32, #tpu.memory_space<vmem>>, vector<1x1x64xf32>
    %16 = vector.shape_cast %15 : vector<1x1x64xf32> to vector<1x64xf32>
    %17 = vector.broadcast %16 : vector<1x64xf32> to vector<2x64xf32>
    %18 = arith.addf %14, %17 : vector<2x64xf32>
    %c0_13 = arith.constant 0 : index
    %c0_14 = arith.constant 0 : index
    %19 = vector.load %arg6[%c0_13, %c0_14] : memref<2x64xf32, #tpu.memory_space<vmem>>, vector<2x64xf32>
    tpu.vector_store %arg6[%c0_13, %c0_14], %18 {strides = array<i32>} : memref<2x64xf32, #tpu.memory_space<vmem>>, vector<2x64xf32>,
    return
  }
  func.func @transform_0(%arg0: i32) -> (i32, i32) {
    %c0_i32 = arith.constant 0 : i32
    %c0_i32_0 = arith.constant 0 : i32
    return %arg0, %c0_i32 : i32, i32
  }
  func.func @transform_1(%arg0: i32) -> (i32, i32) {
    %c0_i32 = arith.constant 0 : i32
    %c0_i32_0 = arith.constant 0 : i32
    %c0_i32_1 = arith.constant 0 : i32
    return %c0_i32, %c0_i32_0 : i32, i32
  }
  func.func @transform_2(%arg0: i32) -> (i32, i32) {
    %c0_i32 = arith.constant 0 : i32
    %c0_i32_0 = arith.constant 0 : i32
    %c0_i32_1 = arith.constant 0 : i32
    return %c0_i32, %c0_i32_0 : i32, i32
  }
  func.func @transform_3(%arg0: i32) -> (i32, i32, i32) {
    %c0_i32 = arith.constant 0 : i32
    %c0_i32_0 = arith.constant 0 : i32
    %c0_i32_1 = arith.constant 0 : i32
    %c0_i32_2 = arith.constant 0 : i32
    return %c0_i32, %c0_i32_0, %c0_i32_1 : i32, i32, i32
  }
  func.func @transform_4(%arg0: i32) -> (i32, i32, i32) {
    %c0_i32 = arith.constant 0 : i32
    %c0_i32_0 = arith.constant 0 : i32
    %c0_i32_1 = arith.constant 0 : i32
    %c0_i32_2 = arith.constant 0 : i32
    return %c0_i32, %c0_i32_0, %c0_i32_1 : i32, i32, i32
  }
  func.func @transform_5(%arg0: i32) -> (i32, i32) {
    %c0_i32 = arith.constant 0 : i32
    %c0_i32_0 = arith.constant 0 : i32
    return %arg0, %c0_i32 : i32, i32
  }
}

</mosaic_0001>

<llo_original>
// kernel: tpu_custom_call.1
$region0: #{tpu_custom_call.1}
  #allocation0 [shape = 'u32[]', space=smem, size = 0x4, offset = 0x4, fixed_abs, tag = 'smem constant byte address 0x4 - core index']
  #allocation1 [shape = 'u32[144,128]{1,0:T(1,128)}', space=vmem, size = 0x12000, scoped, tag = 'internal scratch']
  %s0 = inlined_call_operand.hbm [shape: f32[2,32], index: 0, kind: input, shape index: {}]
  %s1 = inlined_call_operand.hbm [shape: f32[32,64], index: 1, kind: input, shape index: {}]
  %s2 = inlined_call_operand.vmem [shape: f32[1,64], index: 2, kind: input, shape index: {}]
  %s3 = inlined_call_operand.hbm [shape: f32[1,64,64], index: 3, kind: input, shape index: {}]
  %s4 = inlined_call_operand.vmem [shape: f32[1,1,64], index: 4, kind: input, shape index: {}]
  %s5 = inlined_call_operand.hbm [shape: f32[2,64], index: 5, kind: output, shape index: {}]
  %s6 = sld [smem:[#allocation0]]
  $region42: #{tpu_custom_call.1} parent=0
    _
  %s8 = ssub.s32 1, %s6
  %s9 = scalar_select 0, %s8, %s6
  $region1: #{tpu_custom_call.1} parent=0
    #allocation2 [shape = 'u8[1024]{0}', space=vmem, size = 0x400, scoped, tag = 'input window, operand 0, single buffered']
    #allocation3 [shape = 's32[1]{0}', space=sflag, size = 0x4, scoped, tag = 'scoped memory for tpu_custom_call.1']
    #allocation4 [shape = 's32[1]{0}', space=sflag, size = 0x4, scoped, tag = 'scoped memory for tpu_custom_call.1']
    #allocation5 [shape = 'u8[16384]{0}', space=vmem, size = 0x4000, scoped, tag = 'input window, operand 1, single buffered']
    #allocation6 [shape = 's32[1]{0}', space=sflag, size = 0x4, scoped, tag = 'scoped memory for tpu_custom_call.1']
    #allocation7 [shape = 'u8[32768]{0}', space=vmem, size = 0x8000, scoped, tag = 'input window, operand 3, single buffered']
    #allocation8 [shape = 'u8[1024]{0}', space=vmem, size = 0x400, scoped, tag = 'output window, operand 0, single buffered']
    %10 = vsyncpa [#allocation3], 0
    %11 = vsyncpa [#allocation6], 0
    %12 = vsyncpa [#allocation4], 0
    // Predicated region
    $region2: #{tpu_custom_call.1} parent=1 // pred_check
      _
    $region3: #{tpu_custom_call.1} parent=1 // pred_check_branch
      %14 = sbr.rel (0) target = $region5
    $region4: #{tpu_custom_call.1} parent=1 // pred_region
      %s16 = ssub.s32 32, 32
      %17 = vsyncadd [#allocation3], %s16
      %s19 = sshll.u32 [#allocation2], 4
      %s20 = int_to_ptr.vmem [resolvable:$true] %s19
      %22 = dma.hbm_to_vmem [thread:$0]  %s0, 32, %s20, [#allocation3]
    $region5: #{tpu_custom_call.1} parent=1 // pred_fallthru
      _
    // Predicated region
    $region6: #{tpu_custom_call.1} parent=1 // pred_check
      _
    $region7: #{tpu_custom_call.1} parent=1 // pred_check_branch
      %24 = sbr.rel (0) target = $region9
    $region8: #{tpu_custom_call.1} parent=1 // pred_region
      %s26 = ssub.s32 512, 512
      %27 = vsyncadd [#allocation6], %s26
      %s28 = sshll.u32 [#allocation5], 4
      %s29 = int_to_ptr.vmem [resolvable:$true] %s28
      %34 = dma.hbm_to_vmem [thread:$0]  %s1, 512, %s29, [#allocation6], 128, 128, 8
    $region9: #{tpu_custom_call.1} parent=1 // pred_fallthru
      _
    // Predicated region
    $region10: #{tpu_custom_call.1} parent=1 // pred_check
      _
    $region11: #{tpu_custom_call.1} parent=1 // pred_check_branch
      %36 = sbr.rel (0) target = $region13
    $region12: #{tpu_custom_call.1} parent=1 // pred_region
      _
    $region13: #{tpu_custom_call.1} parent=1 // pred_fallthru
      _
    // Predicated region
    $region14: #{tpu_custom_call.1} parent=1 // pred_check
      _
    $region15: #{tpu_custom_call.1} parent=1 // pred_check_branch
      %38 = sbr.rel (0) target = $region17
    $region16: #{tpu_custom_call.1} parent=1 // pred_region
      %s40 = ssub.s32 1024, 1024
      %41 = vsyncadd [#allocation6], %s40
      %s42 = sshll.u32 [#allocation7], 4
      %s43 = int_to_ptr.vmem [resolvable:$true] %s42
      %48 = dma.hbm_to_vmem [thread:$0]  %s3, 1024, %s43, [#allocation6], 128, 128, 8
    $region17: #{tpu_custom_call.1} parent=1 // pred_fallthru
      _
    // Predicated region
    $region18: #{tpu_custom_call.1} parent=1 // pred_check
      _
    $region19: #{tpu_custom_call.1} parent=1 // pred_check_branch
      %50 = sbr.rel (0) target = $region21
    $region20: #{tpu_custom_call.1} parent=1 // pred_region
      _
    $region21: #{tpu_custom_call.1} parent=1 // pred_fallthru
      _
    // Predicated region
    $region22: #{tpu_custom_call.1} parent=1 // pred_check
      _
    $region23: #{tpu_custom_call.1} parent=1 // pred_check_branch
      %52 = sbr.rel (0) target = $region25
    $region24: #{tpu_custom_call.1} parent=1 // pred_region
      %53 = dma.done [#allocation3], 32
    $region25: #{tpu_custom_call.1} parent=1 // pred_fallthru
      _
    // Predicated region
    $region26: #{tpu_custom_call.1} parent=1 // pred_check
      _
    $region27: #{tpu_custom_call.1} parent=1 // pred_check_branch
      %55 = sbr.rel (0) target = $region29
    $region28: #{tpu_custom_call.1} parent=1 // pred_region
      %56 = dma.done [#allocation6], 512
    $region29: #{tpu_custom_call.1} parent=1 // pred_fallthru
      _
    // Predicated region
    $region30: #{tpu_custom_call.1} parent=1 // pred_check
      _
    $region31: #{tpu_custom_call.1} parent=1 // pred_check_branch
      %58 = sbr.rel (0) target = $region33
    $region32: #{tpu_custom_call.1} parent=1 // pred_region
      %59 = dma.done [#allocation6], 1024
    $region33: #{tpu_custom_call.1} parent=1 // pred_fallthru
      _
    %v60 = vld [vmem:[#allocation2] sm:$0x3]
    %v61 = vld [vmem:[#allocation5] sm:$0xff]
    %v62 = vld [vmem:[#allocation5 + $0x8] sm:$0xff]
    %v63 = vld [vmem:[#allocation5 + $0x10] sm:$0xff]
    %v64 = vld [vmem:[#allocation5 + $0x18] sm:$0xff]
    %v65 = vld [vmem:[%s2] sm:$0x1]
    %v67 = vlaneseq
    %v68 = vshrl.u32 %v67, 7
    %v69 = vsub.s32 0, %v68
    %v70 = vrot.slane %v65, %v69
    %vm72 = vcmask 261120
    %v74 = vsel %vm72, %v60, 0
    %76 = vmatprep.subr.mxu0 0.0
    %77 = vmatpush1.msra.mxu0 0.0
    %78 = vmatprep.subr.mxu0 0.0
    %79 = vmatpush1.msra.mxu0 0.0
    %80 = vmatprep.subr.mxu0 0.0
    %81 = vmatpush1.msra.mxu0 0.0
    %82 = vmatprep.subr.mxu0 0.0
    %83 = vmatpush1.msra.mxu0 0.0
    %84 = vmatprep.subr.mxu0 0.0
    %85 = vmatpush1.msra.mxu0 0.0
    %86 = vmatprep.subr.mxu0 0.0
    %87 = vmatpush1.msra.mxu0 0.0
    %88 = vmatprep.subr.mxu0 0.0
    %89 = vmatpush1.msra.mxu0 0.0
    %90 = vmatprep.subr.mxu0 0.0
    %91 = vmatpush1.msra.mxu0 0.0
    %92 = vmatprep.subr.mxu0 0.0
    %93 = vmatpush1.msra.mxu0 0.0
    %94 = vmatprep.subr.mxu0 0.0
    %95 = vmatpush1.msra.mxu0 0.0
    %96 = vmatprep.subr.mxu0 0.0
    %97 = vmatpush1.msra.mxu0 0.0
    %98 = vmatprep.subr.mxu0 0.0
    %99 = vmatpush1.msra.mxu0 0.0
    %100 = vmatprep.subr.mxu0 0.0
    %v101 = vand.u32 %v64, 4294901760
    %102 = vmatpush1.msra.mxu0 %v101
    %103 = vmatprep.subr.mxu0 0.0
    %v104 = vand.u32 %v63, 4294901760
    %105 = vmatpush1.msra.mxu0 %v104
    %106 = vmatprep.subr.mxu0 0.0
    %v107 = vand.u32 %v62, 4294901760
    %108 = vmatpush1.msra.mxu0 %v107
    %109 = vmatprep.subr.mxu0 0.0
    %v110 = vand.u32 %v61, 4294901760
    %111 = vmatpush1.msra.mxu0 %v110
    %112 = vmatprep.subr.mxu0 0.0
    %113 = vmatpush2.msra.mxu0 0.0
    %114 = vmatprep.subr.mxu0 0.0
    %115 = vmatpush2.msra.mxu0 0.0
    %116 = vmatprep.subr.mxu0 0.0
    %117 = vmatpush2.msra.mxu0 0.0
    %118 = vmatprep.subr.mxu0 0.0
    %119 = vmatpush2.msra.mxu0 0.0
    %120 = vmatprep.subr.mxu0 0.0
    %121 = vmatpush2.msra.mxu0 0.0
    %122 = vmatprep.subr.mxu0 0.0
    %123 = vmatpush2.msra.mxu0 0.0
    %124 = vmatprep.subr.mxu0 0.0
    %125 = vmatpush2.msra.mxu0 0.0
    %126 = vmatprep.subr.mxu0 0.0
    %127 = vmatpush2.msra.mxu0 0.0
    %128 = vmatprep.subr.mxu0 0.0
    %129 = vmatpush2.msra.mxu0 0.0
    %130 = vmatprep.subr.mxu0 0.0
    %131 = vmatpush2.msra.mxu0 0.0
    %132 = vmatprep.subr.mxu0 0.0
    %133 = vmatpush2.msra.mxu0 0.0
    %134 = vmatprep.subr.mxu0 0.0
    %135 = vmatpush2.msra.mxu0 0.0
    %136 = vmatprep.subr.mxu0 0.0
    %137 = vmatpush2.msra.mxu0 0.0
    %138 = vmatprep.subr.mxu0 0.0
    %139 = vmatpush2.msra.mxu0 0.0
    %140 = vmatprep.subr.mxu0 0.0
    %141 = vmatpush2.msra.mxu0 0.0
    %142 = vmatprep.subr.mxu0 0.0
    %143 = vmatpush2.msra.mxu0 0.0
    %144 = vmatprep.mubr.f32.mxu0 0.0
    %v145 = vand.u32 %v74, 4294901760
    %v146 = vsub.f32 %v74, %v145
    %v147 = vand.u32 %v146, 4294901760
    %v148 = vsub.f32 %v146, %v147
    %v149 = vand.u32 %v148, 4294901760
    %150 = vmatmul.mubr.f32.gmra.mxu0 %v149
    %v151 = vpop.f32.mrf.mxu0
    %v152 = vadd.f32 %v70, %v151
    %v153 = vpop.f32.mrf.mxu0
    %154 = vdwg.mxu0
    %155 = vmatprep.subr.mxu0 0.0
    %156 = vmatpush1.msra.mxu0 0.0
    %157 = vmatprep.subr.mxu0 0.0
    %158 = vmatpush1.msra.mxu0 0.0
    %159 = vmatprep.subr.mxu0 0.0
    %160 = vmatpush1.msra.mxu0 0.0
    %161 = vmatprep.subr.mxu0 0.0
    %162 = vmatpush1.msra.mxu0 0.0
    %163 = vmatprep.subr.mxu0 0.0
    %164 = vmatpush1.msra.mxu0 0.0
    %165 = vmatprep.subr.mxu0 0.0
    %166 = vmatpush1.msra.mxu0 0.0
    %167 = vmatprep.subr.mxu0 0.0
    %168 = vmatpush1.msra.mxu0 0.0
    %169 = vmatprep.subr.mxu0 0.0
    %170 = vmatpush1.msra.mxu0 0.0
    %171 = vmatprep.subr.mxu0 0.0
    %172 = vmatpush1.msra.mxu0 0.0
    %173 = vmatprep.subr.mxu0 0.0
    %174 = vmatpush1.msra.mxu0 0.0
    %175 = vmatprep.subr.mxu0 0.0
    %176 = vmatpush1.msra.mxu0 0.0
    %177 = vmatprep.subr.mxu0 0.0
    %178 = vmatpush1.msra.mxu0 0.0
    %179 = vmatprep.subr.mxu0 0.0
    %v180 = vand.u32 %v64, 4294901760
    %v181 = vsub.f32 %v64, %v180
    %v182 = vand.u32 %v181, 4294901760
    %v183 = vsub.f32 %v181, %v182
    %v184 = vand.u32 %v183, 4294901760
    %185 = vmatpush1.msra.mxu0 %v184
    %186 = vmatprep.subr.mxu0 0.0
    %v187 = vand.u32 %v63, 4294901760
    %v188 = vsub.f32 %v63, %v187
    %v189 = vand.u32 %v188, 4294901760
    %v190 = vsub.f32 %v188, %v189
    %v191 = vand.u32 %v190, 4294901760
    %192 = vmatpush1.msra.mxu0 %v191
    %193 = vmatprep.subr.mxu0 0.0
    %v194 = vand.u32 %v62, 4294901760
    %v195 = vsub.f32 %v62, %v194
    %v196 = vand.u32 %v195, 4294901760
    %v197 = vsub.f32 %v195, %v196
    %v198 = vand.u32 %v197, 4294901760
    %199 = vmatpush1.msra.mxu0 %v198
    %200 = vmatprep.subr.mxu0 0.0
    %v201 = vand.u32 %v61, 4294901760
    %v202 = vsub.f32 %v61, %v201
    %v203 = vand.u32 %v202, 4294901760
    %v204 = vsub.f32 %v202, %v203
    %v205 = vand.u32 %v204, 4294901760
    %206 = vmatpush1.msra.mxu0 %v205
    %207 = vmatprep.subr.mxu0 0.0
    %208 = vmatpush2.msra.mxu0 0.0
    %209 = vmatprep.subr.mxu0 0.0
    %210 = vmatpush2.msra.mxu0 0.0
    %211 = vmatprep.subr.mxu0 0.0
    %212 = vmatpush2.msra.mxu0 0.0
    %213 = vmatprep.subr.mxu0 0.0
    %214 = vmatpush2.msra.mxu0 0.0
    %215 = vmatprep.subr.mxu0 0.0
    %216 = vmatpush2.msra.mxu0 0.0
    %217 = vmatprep.subr.mxu0 0.0
    %218 = vmatpush2.msra.mxu0 0.0
    %219 = vmatprep.subr.mxu0 0.0
    %220 = vmatpush2.msra.mxu0 0.0
    %221 = vmatprep.subr.mxu0 0.0
    %222 = vmatpush2.msra.mxu0 0.0
    %223 = vmatprep.subr.mxu0 0.0
    %224 = vmatpush2.msra.mxu0 0.0
    %225 = vmatprep.subr.mxu0 0.0
    %226 = vmatpush2.msra.mxu0 0.0
    %227 = vmatprep.subr.mxu0 0.0
    %228 = vmatpush2.msra.mxu0 0.0
    %229 = vmatprep.subr.mxu0 0.0
    %230 = vmatpush2.msra.mxu0 0.0
    %231 = vmatprep.subr.mxu0 0.0
    %232 = vmatpush2.msra.mxu0 0.0
    %233 = vmatprep.subr.mxu0 0.0
    %234 = vmatpush2.msra.mxu0 0.0
    %235 = vmatprep.subr.mxu0 0.0
    %236 = vmatpush2.msra.mxu0 0.0
    %237 = vmatprep.subr.mxu0 0.0
    %238 = vmatpush2.msra.mxu0 0.0
    %239 = vmatprep.mubr.f32.mxu0 0.0
    %v240 = vand.u32 %v74, 4294901760
    %241 = vmatmul.mubr.f32.gmra.mxu0 %v240
    %v242 = vpop.f32.mrf.mxu0
    %v243 = vadd.f32 %v152, %v242
    %v244 = vpop.f32.mrf.mxu0
    %245 = vdwg.mxu0
    %246 = vmatprep.subr.mxu0 0.0
    %247 = vmatpush1.msra.mxu0 0.0
    %248 = vmatprep.subr.mxu0 0.0
    %249 = vmatpush1.msra.mxu0 0.0
    %250 = vmatprep.subr.mxu0 0.0
    %251 = vmatpush1.msra.mxu0 0.0
    %252 = vmatprep.subr.mxu0 0.0
    %253 = vmatpush1.msra.mxu0 0.0
    %254 = vmatprep.subr.mxu0 0.0
    %255 = vmatpush1.msra.mxu0 0.0
    %256 = vmatprep.subr.mxu0 0.0
    %257 = vmatpush1.msra.mxu0 0.0
    %258 = vmatprep.subr.mxu0 0.0
    %259 = vmatpush1.msra.mxu0 0.0
    %260 = vmatprep.subr.mxu0 0.0
    %261 = vmatpush1.msra.mxu0 0.0
    %262 = vmatprep.subr.mxu0 0.0
    %263 = vmatpush1.msra.mxu0 0.0
    %264 = vmatprep.subr.mxu0 0.0
    %265 = vmatpush1.msra.mxu0 0.0
    %266 = vmatprep.subr.mxu0 0.0
    %267 = vmatpush1.msra.mxu0 0.0
    %268 = vmatprep.subr.mxu0 0.0
    %269 = vmatpush1.msra.mxu0 0.0
    %270 = vmatprep.subr.mxu0 0.0
    %v271 = vand.u32 %v64, 4294901760
    %v272 = vsub.f32 %v64, %v271
    %273 = vmatpush1.msra.mxu0 %v272
    %274 = vmatprep.subr.mxu0 0.0
    %v275 = vand.u32 %v63, 4294901760
    %v276 = vsub.f32 %v63, %v275
    %277 = vmatpush1.msra.mxu0 %v276
    %278 = vmatprep.subr.mxu0 0.0
    %v279 = vand.u32 %v62, 4294901760
    %v280 = vsub.f32 %v62, %v279
    %281 = vmatpush1.msra.mxu0 %v280
    %282 = vmatprep.subr.mxu0 0.0
    %v283 = vand.u32 %v61, 4294901760
    %v284 = vsub.f32 %v61, %v283
    %285 = vmatpush1.msra.mxu0 %v284
    %286 = vmatprep.subr.mxu0 0.0
    %287 = vmatpush2.msra.mxu0 0.0
    %288 = vmatprep.subr.mxu0 0.0
    %289 = vmatpush2.msra.mxu0 0.0
    %290 = vmatprep.subr.mxu0 0.0
    %291 = vmatpush2.msra.mxu0 0.0
    %292 = vmatprep.subr.mxu0 0.0
    %293 = vmatpush2.msra.mxu0 0.0
    %294 = vmatprep.subr.mxu0 0.0
    %295 = vmatpush2.msra.mxu0 0.0
    %296 = vmatprep.subr.mxu0 0.0
    %297 = vmatpush2.msra.mxu0 0.0
    %298 = vmatprep.subr.mxu0 0.0
    %299 = vmatpush2.msra.mxu0 0.0
    %300 = vmatprep.subr.mxu0 0.0
    %301 = vmatpush2.msra.mxu0 0.0
    %302 = vmatprep.subr.mxu0 0.0
    %303 = vmatpush2.msra.mxu0 0.0
    %304 = vmatprep.subr.mxu0 0.0
    %305 = vmatpush2.msra.mxu0 0.0
    %306 = vmatprep.subr.mxu0 0.0
    %307 = vmatpush2.msra.mxu0 0.0
    %308 = vmatprep.subr.mxu0 0.0
    %309 = vmatpush2.msra.mxu0 0.0
    %310 = vmatprep.subr.mxu0 0.0
    %311 = vmatpush2.msra.mxu0 0.0
    %312 = vmatprep.subr.mxu0 0.0
    %313 = vmatpush2.msra.mxu0 0.0
    %314 = vmatprep.subr.mxu0 0.0
    %315 = vmatpush2.msra.mxu0 0.0
    %316 = vmatprep.subr.mxu0 0.0
    %317 = vmatpush2.msra.mxu0 0.0
    %318 = vmatprep.mubr.f32.mxu0 0.0
    %v319 = vand.u32 %v74, 4294901760
    %v320 = vsub.f32 %v74, %v319
    %321 = vmatmul.mubr.f32.gmra.mxu0 %v320
    %v322 = vpop.f32.mrf.mxu0
    %v323 = vadd.f32 %v243, %v322
    %v324 = vpop.f32.mrf.mxu0
    %325 = vdwg.mxu0
    %326 = vmatprep.subr.mxu0 0.0
    %327 = vmatpush1.msra.mxu0 0.0
    %328 = vmatprep.subr.mxu0 0.0
    %329 = vmatpush1.msra.mxu0 0.0
    %330 = vmatprep.subr.mxu0 0.0
    %331 = vmatpush1.msra.mxu0 0.0
    %332 = vmatprep.subr.mxu0 0.0
    %333 = vmatpush1.msra.mxu0 0.0
    %334 = vmatprep.subr.mxu0 0.0
    %335 = vmatpush1.msra.mxu0 0.0
    %336 = vmatprep.subr.mxu0 0.0
    %337 = vmatpush1.msra.mxu0 0.0
    %338 = vmatprep.subr.mxu0 0.0
    %339 = vmatpush1.msra.mxu0 0.0
    %340 = vmatprep.subr.mxu0 0.0
    %341 = vmatpush1.msra.mxu0 0.0
    %342 = vmatprep.subr.mxu0 0.0
    %343 = vmatpush1.msra.mxu0 0.0
    %344 = vmatprep.subr.mxu0 0.0
    %345 = vmatpush1.msra.mxu0 0.0
    %346 = vmatprep.subr.mxu0 0.0
    %347 = vmatpush1.msra.mxu0 0.0
    %348 = vmatprep.subr.mxu0 0.0
    %349 = vmatpush1.msra.mxu0 0.0
    %350 = vmatprep.subr.mxu0 0.0
    %v351 = vand.u32 %v64, 4294901760
    %352 = vmatpush1.msra.mxu0 %v351
    %353 = vmatprep.subr.mxu0 0.0
    %v354 = vand.u32 %v63, 4294901760
    %355 = vmatpush1.msra.mxu0 %v354
    %356 = vmatprep.subr.mxu0 0.0
    %v357 = vand.u32 %v62, 4294901760
    %358 = vmatpush1.msra.mxu0 %v357
    %359 = vmatprep.subr.mxu0 0.0
    %v360 = vand.u32 %v61, 4294901760
    %361 = vmatpush1.msra.mxu0 %v360
    %362 = vmatprep.subr.mxu0 0.0
    %363 = vmatpush2.msra.mxu0 0.0
    %364 = vmatprep.subr.mxu0 0.0
    %365 = vmatpush2.msra.mxu0 0.0
    %366 = vmatprep.subr.mxu0 0.0
    %367 = vmatpush2.msra.mxu0 0.0
    %368 = vmatprep.subr.mxu0 0.0
    %369 = vmatpush2.msra.mxu0 0.0
    %370 = vmatprep.subr.mxu0 0.0
    %371 = vmatpush2.msra.mxu0 0.0
    %372 = vmatprep.subr.mxu0 0.0
    %373 = vmatpush2.msra.mxu0 0.0
    %374 = vmatprep.subr.mxu0 0.0
    %375 = vmatpush2.msra.mxu0 0.0
    %376 = vmatprep.subr.mxu0 0.0
    %377 = vmatpush2.msra.mxu0 0.0
    %378 = vmatprep.subr.mxu0 0.0
    %379 = vmatpush2.msra.mxu0 0.0
    %380 = vmatprep.subr.mxu0 0.0
    %381 = vmatpush2.msra.mxu0 0.0
    %382 = vmatprep.subr.mxu0 0.0
    %383 = vmatpush2.msra.mxu0 0.0
    %384 = vmatprep.subr.mxu0 0.0
    %385 = vmatpush2.msra.mxu0 0.0
    %386 = vmatprep.subr.mxu0 0.0
    %387 = vmatpush2.msra.mxu0 0.0
    %388 = vmatprep.subr.mxu0 0.0
    %389 = vmatpush2.msra.mxu0 0.0
    %390 = vmatprep.subr.mxu0 0.0
    %391 = vmatpush2.msra.mxu0 0.0
    %392 = vmatprep.subr.mxu0 0.0
    %393 = vmatpush2.msra.mxu0 0.0
    %394 = vmatprep.mubr.f32.mxu0 0.0
    %v395 = vand.u32 %v74, 4294901760
    %v396 = vsub.f32 %v74, %v395
    %v397 = vand.u32 %v396, 4294901760
    %398 = vmatmul.mubr.f32.gmra.mxu0 %v397
    %v399 = vpop.f32.mrf.mxu0
    %v400 = vadd.f32 %v323, %v399
    %v401 = vpop.f32.mrf.mxu0
    %402 = vdwg.mxu0
    %403 = vmatprep.subr.mxu0 0.0
    %404 = vmatpush1.msra.mxu0 0.0
    %405 = vmatprep.subr.mxu0 0.0
    %406 = vmatpush1.msra.mxu0 0.0
    %407 = vmatprep.subr.mxu0 0.0
    %408 = vmatpush1.msra.mxu0 0.0
    %409 = vmatprep.subr.mxu0 0.0
    %410 = vmatpush1.msra.mxu0 0.0
    %411 = vmatprep.subr.mxu0 0.0
    %412 = vmatpush1.msra.mxu0 0.0
    %413 = vmatprep.subr.mxu0 0.0
    %414 = vmatpush1.msra.mxu0 0.0
    %415 = vmatprep.subr.mxu0 0.0
    %416 = vmatpush1.msra.mxu0 0.0
    %417 = vmatprep.subr.mxu0 0.0
    %418 = vmatpush1.msra.mxu0 0.0
    %419 = vmatprep.subr.mxu0 0.0
    %420 = vmatpush1.msra.mxu0 0.0
    %421 = vmatprep.subr.mxu0 0.0
    %422 = vmatpush1.msra.mxu0 0.0
    %423 = vmatprep.subr.mxu0 0.0
    %424 = vmatpush1.msra.mxu0 0.0
    %425 = vmatprep.subr.mxu0 0.0
    %426 = vmatpush1.msra.mxu0 0.0
    %427 = vmatprep.subr.mxu0 0.0
    %v428 = vand.u32 %v64, 4294901760
    %v429 = vsub.f32 %v64, %v428
    %v430 = vand.u32 %v429, 4294901760
    %431 = vmatpush1.msra.mxu0 %v430
    %432 = vmatprep.subr.mxu0 0.0
    %v433 = vand.u32 %v63, 4294901760
    %v434 = vsub.f32 %v63, %v433
    %v435 = vand.u32 %v434, 4294901760
    %436 = vmatpush1.msra.mxu0 %v435
    %437 = vmatprep.subr.mxu0 0.0
    %v438 = vand.u32 %v62, 4294901760
    %v439 = vsub.f32 %v62, %v438
    %v440 = vand.u32 %v439, 4294901760
    %441 = vmatpush1.msra.mxu0 %v440
    %442 = vmatprep.subr.mxu0 0.0
    %v443 = vand.u32 %v61, 4294901760
    %v444 = vsub.f32 %v61, %v443
    %v445 = vand.u32 %v444, 4294901760
    %446 = vmatpush1.msra.mxu0 %v445
    %447 = vmatprep.subr.mxu0 0.0
    %448 = vmatpush2.msra.mxu0 0.0
    %449 = vmatprep.subr.mxu0 0.0
    %450 = vmatpush2.msra.mxu0 0.0
    %451 = vmatprep.subr.mxu0 0.0
    %452 = vmatpush2.msra.mxu0 0.0
    %453 = vmatprep.subr.mxu0 0.0
    %454 = vmatpush2.msra.mxu0 0.0
    %455 = vmatprep.subr.mxu0 0.0
    %456 = vmatpush2.msra.mxu0 0.0
    %457 = vmatprep.subr.mxu0 0.0
    %458 = vmatpush2.msra.mxu0 0.0
    %459 = vmatprep.subr.mxu0 0.0
    %460 = vmatpush2.msra.mxu0 0.0
    %461 = vmatprep.subr.mxu0 0.0
    %462 = vmatpush2.msra.mxu0 0.0
    %463 = vmatprep.subr.mxu0 0.0
    %464 = vmatpush2.msra.mxu0 0.0
    %465 = vmatprep.subr.mxu0 0.0
    %466 = vmatpush2.msra.mxu0 0.0
    %467 = vmatprep.subr.mxu0 0.0
    %468 = vmatpush2.msra.mxu0 0.0
    %469 = vmatprep.subr.mxu0 0.0
    %470 = vmatpush2.msra.mxu0 0.0
    %471 = vmatprep.subr.mxu0 0.0
    %472 = vmatpush2.msra.mxu0 0.0
    %473 = vmatprep.subr.mxu0 0.0
    %474 = vmatpush2.msra.mxu0 0.0
    %475 = vmatprep.subr.mxu0 0.0
    %476 = vmatpush2.msra.mxu0 0.0
    %477 = vmatprep.subr.mxu0 0.0
    %478 = vmatpush2.msra.mxu0 0.0
    %479 = vmatprep.mubr.f32.mxu0 0.0
    %v480 = vand.u32 %v74, 4294901760
    %481 = vmatmul.mubr.f32.gmra.mxu0 %v480
    %v482 = vpop.f32.mrf.mxu0
    %v483 = vadd.f32 %v400, %v482
    %v484 = vpop.f32.mrf.mxu0
    %485 = vdwg.mxu0
    %486 = vmatprep.subr.mxu0 0.0
    %487 = vmatpush1.msra.mxu0 0.0
    %488 = vmatprep.subr.mxu0 0.0
    %489 = vmatpush1.msra.mxu0 0.0
    %490 = vmatprep.subr.mxu0 0.0
    %491 = vmatpush1.msra.mxu0 0.0
    %492 = vmatprep.subr.mxu0 0.0
    %493 = vmatpush1.msra.mxu0 0.0
    %494 = vmatprep.subr.mxu0 0.0
    %495 = vmatpush1.msra.mxu0 0.0
    %496 = vmatprep.subr.mxu0 0.0
    %497 = vmatpush1.msra.mxu0 0.0
    %498 = vmatprep.subr.mxu0 0.0
    %499 = vmatpush1.msra.mxu0 0.0
    %500 = vmatprep.subr.mxu0 0.0
    %501 = vmatpush1.msra.mxu0 0.0
    %502 = vmatprep.subr.mxu0 0.0
    %503 = vmatpush1.msra.mxu0 0.0
    %504 = vmatprep.subr.mxu0 0.0
    %505 = vmatpush1.msra.mxu0 0.0
    %506 = vmatprep.subr.mxu0 0.0
    %507 = vmatpush1.msra.mxu0 0.0
    %508 = vmatprep.subr.mxu0 0.0
    %509 = vmatpush1.msra.mxu0 0.0
    %510 = vmatprep.subr.mxu0 0.0
    %v511 = vand.u32 %v64, 4294901760
    %512 = vmatpush1.msra.mxu0 %v511
    %513 = vmatprep.subr.mxu0 0.0
    %v514 = vand.u32 %v63, 4294901760
    %515 = vmatpush1.msra.mxu0 %v514
    %516 = vmatprep.subr.mxu0 0.0
    %v517 = vand.u32 %v62, 4294901760
    %518 = vmatpush1.msra.mxu0 %v517
    %519 = vmatprep.subr.mxu0 0.0
    %v520 = vand.u32 %v61, 4294901760
    %521 = vmatpush1.msra.mxu0 %v520
    %522 = vmatprep.subr.mxu0 0.0
    %523 = vmatpush2.msra.mxu0 0.0
    %524 = vmatprep.subr.mxu0 0.0
    %525 = vmatpush2.msra.mxu0 0.0
    %526 = vmatprep.subr.mxu0 0.0
    %527 = vmatpush2.msra.mxu0 0.0
    %528 = vmatprep.subr.mxu0 0.0
    %529 = vmatpush2.msra.mxu0 0.0
    %530 = vmatprep.subr.mxu0 0.0
    %531 = vmatpush2.msra.mxu0 0.0
    %532 = vmatprep.subr.mxu0 0.0
    %533 = vmatpush2.msra.mxu0 0.0
    %534 = vmatprep.subr.mxu0 0.0
    %535 = vmatpush2.msra.mxu0 0.0
    %536 = vmatprep.subr.mxu0 0.0
    %537 = vmatpush2.msra.mxu0 0.0
    %538 = vmatprep.subr.mxu0 0.0
    %539 = vmatpush2.msra.mxu0 0.0
    %540 = vmatprep.subr.mxu0 0.0
    %541 = vmatpush2.msra.mxu0 0.0
    %542 = vmatprep.subr.mxu0 0.0
    %543 = vmatpush2.msra.mxu0 0.0
    %544 = vmatprep.subr.mxu0 0.0
    %545 = vmatpush2.msra.mxu0 0.0
    %546 = vmatprep.subr.mxu0 0.0
    %547 = vmatpush2.msra.mxu0 0.0
    %548 = vmatprep.subr.mxu0 0.0
    %549 = vmatpush2.msra.mxu0 0.0
    %550 = vmatprep.subr.mxu0 0.0
    %551 = vmatpush2.msra.mxu0 0.0
    %552 = vmatprep.subr.mxu0 0.0
    %553 = vmatpush2.msra.mxu0 0.0
    %554 = vmatprep.mubr.f32.mxu0 0.0
    %v555 = vand.u32 %v74, 4294901760
    %556 = vmatmul.mubr.f32.gmra.mxu0 %v555
    %v557 = vpop.f32.mrf.mxu0
    %v558 = vadd.f32 %v483, %v557
    %v559 = vpop.f32.mrf.mxu0
    %560 = vdwg.mxu0
    %v561 = vxor.u32 %v558, 2147483648
    %v562 = vmul.f32 %v561, 1.442695
    %v563 = vpow.pop %v562
    %v564 = vadd.f32 %v563, 1.0
    %v565 = vrcp.pop %v564
    %v566 = vmul.f32 1.0, %v565
    %v567 = vmul.f32 %v558, %v566
    %v568 = vld [vmem:[#allocation7] sm:$0xff]
    %v569 = vld [vmem:[#allocation7 + $0x8] sm:$0xff]
    %v570 = vld [vmem:[#allocation7 + $0x10] sm:$0xff]
    %v571 = vld [vmem:[#allocation7 + $0x18] sm:$0xff]
    %v572 = vld [vmem:[#allocation7 + $0x20] sm:$0xff]
    %v573 = vld [vmem:[#allocation7 + $0x28] sm:$0xff]
    %v574 = vld [vmem:[#allocation7 + $0x30] sm:$0xff]
    %v575 = vld [vmem:[#allocation7 + $0x38] sm:$0xff]
    %v576 = vld [vmem:[%s4] sm:$0x1]
    %v578 = vlaneseq
    %v579 = vshrl.u32 %v578, 7
    %v580 = vsub.s32 0, %v579
    %v581 = vrot.slane %v576, %v580
    %vm583 = vcmask 523264
    %v585 = vsel %vm583, %v567, 0
    %587 = vmatprep.subr.mxu0 0.0
    %588 = vmatpush1.msra.mxu0 0.0
    %589 = vmatprep.subr.mxu0 0.0
    %590 = vmatpush1.msra.mxu0 0.0
    %591 = vmatprep.subr.mxu0 0.0
    %592 = vmatpush1.msra.mxu0 0.0
    %593 = vmatprep.subr.mxu0 0.0
    %594 = vmatpush1.msra.mxu0 0.0
    %595 = vmatprep.subr.mxu0 0.0
    %596 = vmatpush1.msra.mxu0 0.0
    %597 = vmatprep.subr.mxu0 0.0
    %598 = vmatpush1.msra.mxu0 0.0
    %599 = vmatprep.subr.mxu0 0.0
    %600 = vmatpush1.msra.mxu0 0.0
    %601 = vmatprep.subr.mxu0 0.0
    %602 = vmatpush1.msra.mxu0 0.0
    %603 = vmatprep.subr.mxu0 0.0
    %v604 = vand.u32 %v575, 4294901760
    %605 = vmatpush1.msra.mxu0 %v604
    %606 = vmatprep.subr.mxu0 0.0
    %v607 = vand.u32 %v574, 4294901760
    %608 = vmatpush1.msra.mxu0 %v607
    %609 = vmatprep.subr.mxu0 0.0
    %v610 = vand.u32 %v573, 4294901760
    %611 = vmatpush1.msra.mxu0 %v610
    %612 = vmatprep.subr.mxu0 0.0
    %v613 = vand.u32 %v572, 4294901760
    %614 = vmatpush1.msra.mxu0 %v613
    %615 = vmatprep.subr.mxu0 0.0
    %v616 = vand.u32 %v571, 4294901760
    %617 = vmatpush1.msra.mxu0 %v616
    %618 = vmatprep.subr.mxu0 0.0
    %v619 = vand.u32 %v570, 4294901760
    %620 = vmatpush1.msra.mxu0 %v619
    %621 = vmatprep.subr.mxu0 0.0
    %v622 = vand.u32 %v569, 4294901760
    %623 = vmatpush1.msra.mxu0 %v622
    %624 = vmatprep.subr.mxu0 0.0
    %v625 = vand.u32 %v568, 4294901760
    %626 = vmatpush1.msra.mxu0 %v625
    %627 = vmatprep.subr.mxu0 0.0
    %628 = vmatpush2.msra.mxu0 0.0
    %629 = vmatprep.subr.mxu0 0.0
    %630 = vmatpush2.msra.mxu0 0.0
    %631 = vmatprep.subr.mxu0 0.0
    %632 = vmatpush2.msra.mxu0 0.0
    %633 = vmatprep.subr.mxu0 0.0
    %634 = vmatpush2.msra.mxu0 0.0
    %635 = vmatprep.subr.mxu0 0.0
    %636 = vmatpush2.msra.mxu0 0.0
    %637 = vmatprep.subr.mxu0 0.0
    %638 = vmatpush2.msra.mxu0 0.0
    %639 = vmatprep.subr.mxu0 0.0
    %640 = vmatpush2.msra.mxu0 0.0
    %641 = vmatprep.subr.mxu0 0.0
    %642 = vmatpush2.msra.mxu0 0.0
    %643 = vmatprep.subr.mxu0 0.0
    %644 = vmatpush2.msra.mxu0 0.0
    %645 = vmatprep.subr.mxu0 0.0
    %646 = vmatpush2.msra.mxu0 0.0
    %647 = vmatprep.subr.mxu0 0.0
    %648 = vmatpush2.msra.mxu0 0.0
    %649 = vmatprep.subr.mxu0 0.0
    %650 = vmatpush2.msra.mxu0 0.0
    %651 = vmatprep.subr.mxu0 0.0
    %652 = vmatpush2.msra.mxu0 0.0
    %653 = vmatprep.subr.mxu0 0.0
    %654 = vmatpush2.msra.mxu0 0.0
    %655 = vmatprep.subr.mxu0 0.0
    %656 = vmatpush2.msra.mxu0 0.0
    %657 = vmatprep.subr.mxu0 0.0
    %658 = vmatpush2.msra.mxu0 0.0
    %659 = vmatprep.mubr.f32.mxu0 0.0
    %v660 = vand.u32 %v585, 4294901760
    %v661 = vsub.f32 %v585, %v660
    %v662 = vand.u32 %v661, 4294901760
    %v663 = vsub.f32 %v661, %v662
    %v664 = vand.u32 %v663, 4294901760
    %665 = vmatmul.mubr.f32.gmra.mxu0 %v664
    %v666 = vpop.f32.mrf.mxu0
    %v667 = vadd.f32 %v581, %v666
    %v668 = vpop.f32.mrf.mxu0
    %669 = vdwg.mxu0
    %670 = vmatprep.subr.mxu0 0.0
    %671 = vmatpush1.msra.mxu0 0.0
    %672 = vmatprep.subr.mxu0 0.0
    %673 = vmatpush1.msra.mxu0 0.0
    %674 = vmatprep.subr.mxu0 0.0
    %675 = vmatpush1.msra.mxu0 0.0
    %676 = vmatprep.subr.mxu0 0.0
    %677 = vmatpush1.msra.mxu0 0.0
    %678 = vmatprep.subr.mxu0 0.0
    %679 = vmatpush1.msra.mxu0 0.0
    %680 = vmatprep.subr.mxu0 0.0
    %681 = vmatpush1.msra.mxu0 0.0
    %682 = vmatprep.subr.mxu0 0.0
    %683 = vmatpush1.msra.mxu0 0.0
    %684 = vmatprep.subr.mxu0 0.0
    %685 = vmatpush1.msra.mxu0 0.0
    %686 = vmatprep.subr.mxu0 0.0
    %v687 = vand.u32 %v575, 4294901760
    %v688 = vsub.f32 %v575, %v687
    %v689 = vand.u32 %v688, 4294901760
    %v690 = vsub.f32 %v688, %v689
    %v691 = vand.u32 %v690, 4294901760
    %692 = vmatpush1.msra.mxu0 %v691
    %693 = vmatprep.subr.mxu0 0.0
    %v694 = vand.u32 %v574, 4294901760
    %v695 = vsub.f32 %v574, %v694
    %v696 = vand.u32 %v695, 4294901760
    %v697 = vsub.f32 %v695, %v696
    %v698 = vand.u32 %v697, 4294901760
    %699 = vmatpush1.msra.mxu0 %v698
    %700 = vmatprep.subr.mxu0 0.0
    %v701 = vand.u32 %v573, 4294901760
    %v702 = vsub.f32 %v573, %v701
    %v703 = vand.u32 %v702, 4294901760
    %v704 = vsub.f32 %v702, %v703
    %v705 = vand.u32 %v704, 4294901760
    %706 = vmatpush1.msra.mxu0 %v705
    %707 = vmatprep.subr.mxu0 0.0
    %v708 = vand.u32 %v572, 4294901760
    %v709 = vsub.f32 %v572, %v708
    %v710 = vand.u32 %v709, 4294901760
    %v711 = vsub.f32 %v709, %v710
    %v712 = vand.u32 %v711, 4294901760
    %713 = vmatpush1.msra.mxu0 %v712
    %714 = vmatprep.subr.mxu0 0.0
    %v715 = vand.u32 %v571, 4294901760
    %v716 = vsub.f32 %v571, %v715
    %v717 = vand.u32 %v716, 4294901760
    %v718 = vsub.f32 %v716, %v717
    %v719 = vand.u32 %v718, 4294901760
    %720 = vmatpush1.msra.mxu0 %v719
    %721 = vmatprep.subr.mxu0 0.0
    %v722 = vand.u32 %v570, 4294901760
    %v723 = vsub.f32 %v570, %v722
    %v724 = vand.u32 %v723, 4294901760
    %v725 = vsub.f32 %v723, %v724
    %v726 = vand.u32 %v725, 4294901760
    %727 = vmatpush1.msra.mxu0 %v726
    %728 = vmatprep.subr.mxu0 0.0
    %v729 = vand.u32 %v569, 4294901760
    %v730 = vsub.f32 %v569, %v729
    %v731 = vand.u32 %v730, 4294901760
    %v732 = vsub.f32 %v730, %v731
    %v733 = vand.u32 %v732, 4294901760
    %734 = vmatpush1.msra.mxu0 %v733
    %735 = vmatprep.subr.mxu0 0.0
    %v736 = vand.u32 %v568, 4294901760
    %v737 = vsub.f32 %v568, %v736
    %v738 = vand.u32 %v737, 4294901760
    %v739 = vsub.f32 %v737, %v738
    %v740 = vand.u32 %v739, 4294901760
    %741 = vmatpush1.msra.mxu0 %v740
    %742 = vmatprep.subr.mxu0 0.0
    %743 = vmatpush2.msra.mxu0 0.0
    %744 = vmatprep.subr.mxu0 0.0
    %745 = vmatpush2.msra.mxu0 0.0
    %746 = vmatprep.subr.mxu0 0.0
    %747 = vmatpush2.msra.mxu0 0.0
    %748 = vmatprep.subr.mxu0 0.0
    %749 = vmatpush2.msra.mxu0 0.0
    %750 = vmatprep.subr.mxu0 0.0
    %751 = vmatpush2.msra.mxu0 0.0
    %752 = vmatprep.subr.mxu0 0.0
    %753 = vmatpush2.msra.mxu0 0.0
    %754 = vmatprep.subr.mxu0 0.0
    %755 = vmatpush2.msra.mxu0 0.0
    %756 = vmatprep.subr.mxu0 0.0
    %757 = vmatpush2.msra.mxu0 0.0
    %758 = vmatprep.subr.mxu0 0.0
    %759 = vmatpush2.msra.mxu0 0.0
    %760 = vmatprep.subr.mxu0 0.0
    %761 = vmatpush2.msra.mxu0 0.0
    %762 = vmatprep.subr.mxu0 0.0
    %763 = vmatpush2.msra.mxu0 0.0
    %764 = vmatprep.subr.mxu0 0.0
    %765 = vmatpush2.msra.mxu0 0.0
    %766 = vmatprep.subr.mxu0 0.0
    %767 = vmatpush2.msra.mxu0 0.0
    %768 = vmatprep.subr.mxu0 0.0
    %769 = vmatpush2.msra.mxu0 0.0
    %770 = vmatprep.subr.mxu0 0.0
    %771 = vmatpush2.msra.mxu0 0.0
    %772 = vmatprep.subr.mxu0 0.0
    %773 = vmatpush2.msra.mxu0 0.0
    %774 = vmatprep.mubr.f32.mxu0 0.0
    %v775 = vand.u32 %v585, 4294901760
    %776 = vmatmul.mubr.f32.gmra.mxu0 %v775
    %v777 = vpop.f32.mrf.mxu0
    %v778 = vadd.f32 %v667, %v777
    %v779 = vpop.f32.mrf.mxu0
    %780 = vdwg.mxu0
    %781 = vmatprep.subr.mxu0 0.0
    %782 = vmatpush1.msra.mxu0 0.0
    %783 = vmatprep.subr.mxu0 0.0
    %784 = vmatpush1.msra.mxu0 0.0
    %785 = vmatprep.subr.mxu0 0.0
    %786 = vmatpush1.msra.mxu0 0.0
    %787 = vmatprep.subr.mxu0 0.0
    %788 = vmatpush1.msra.mxu0 0.0
    %789 = vmatprep.subr.mxu0 0.0
    %790 = vmatpush1.msra.mxu0 0.0
    %791 = vmatprep.subr.mxu0 0.0
    %792 = vmatpush1.msra.mxu0 0.0
    %793 = vmatprep.subr.mxu0 0.0
    %794 = vmatpush1.msra.mxu0 0.0
    %795 = vmatprep.subr.mxu0 0.0
    %796 = vmatpush1.msra.mxu0 0.0
    %797 = vmatprep.subr.mxu0 0.0
    %v798 = vand.u32 %v575, 4294901760
    %v799 = vsub.f32 %v575, %v798
    %800 = vmatpush1.msra.mxu0 %v799
    %801 = vmatprep.subr.mxu0 0.0
    %v802 = vand.u32 %v574, 4294901760
    %v803 = vsub.f32 %v574, %v802
    %804 = vmatpush1.msra.mxu0 %v803
    %805 = vmatprep.subr.mxu0 0.0
    %v806 = vand.u32 %v573, 4294901760
    %v807 = vsub.f32 %v573, %v806
    %808 = vmatpush1.msra.mxu0 %v807
    %809 = vmatprep.subr.mxu0 0.0
    %v810 = vand.u32 %v572, 4294901760
    %v811 = vsub.f32 %v572, %v810
    %812 = vmatpush1.msra.mxu0 %v811
    %813 = vmatprep.subr.mxu0 0.0
    %v814 = vand.u32 %v571, 4294901760
    %v815 = vsub.f32 %v571, %v814
    %816 = vmatpush1.msra.mxu0 %v815
    %817 = vmatprep.subr.mxu0 0.0
    %v818 = vand.u32 %v570, 4294901760
    %v819 = vsub.f32 %v570, %v818
    %820 = vmatpush1.msra.mxu0 %v819
    %821 = vmatprep.subr.mxu0 0.0
    %v822 = vand.u32 %v569, 4294901760
    %v823 = vsub.f32 %v569, %v822
    %824 = vmatpush1.msra.mxu0 %v823
    %825 = vmatprep.subr.mxu0 0.0
    %v826 = vand.u32 %v568, 4294901760
    %v827 = vsub.f32 %v568, %v826
    %828 = vmatpush1.msra.mxu0 %v827
    %829 = vmatprep.subr.mxu0 0.0
    %830 = vmatpush2.msra.mxu0 0.0
    %831 = vmatprep.subr.mxu0 0.0
    %832 = vmatpush2.msra.mxu0 0.0
    %833 = vmatprep.subr.mxu0 0.0
    %834 = vmatpush2.msra.mxu0 0.0
    %835 = vmatprep.subr.mxu0 0.0
    %836 = vmatpush2.msra.mxu0 0.0
    %837 = vmatprep.subr.mxu0 0.0
    %838 = vmatpush2.msra.mxu0 0.0
    %839 = vmatprep.subr.mxu0 0.0
    %840 = vmatpush2.msra.mxu0 0.0
    %841 = vmatprep.subr.mxu0 0.0
    %842 = vmatpush2.msra.mxu0 0.0
    %843 = vmatprep.subr.mxu0 0.0
    %844 = vmatpush2.msra.mxu0 0.0
    %845 = vmatprep.subr.mxu0 0.0
    %846 = vmatpush2.msra.mxu0 0.0
    %847 = vmatprep.subr.mxu0 0.0
    %848 = vmatpush2.msra.mxu0 0.0
    %849 = vmatprep.subr.mxu0 0.0
    %850 = vmatpush2.msra.mxu0 0.0
    %851 = vmatprep.subr.mxu0 0.0
    %852 = vmatpush2.msra.mxu0 0.0
    %853 = vmatprep.subr.mxu0 0.0
    %854 = vmatpush2.msra.mxu0 0.0
    %855 = vmatprep.subr.mxu0 0.0
    %856 = vmatpush2.msra.mxu0 0.0
    %857 = vmatprep.subr.mxu0 0.0
    %858 = vmatpush2.msra.mxu0 0.0
    %859 = vmatprep.subr.mxu0 0.0
    %860 = vmatpush2.msra.mxu0 0.0
    %861 = vmatprep.mubr.f32.mxu0 0.0
    %v862 = vand.u32 %v585, 4294901760
    %v863 = vsub.f32 %v585, %v862
    %864 = vmatmul.mubr.f32.gmra.mxu0 %v863
    %v865 = vpop.f32.mrf.mxu0
    %v866 = vadd.f32 %v778, %v865
    %v867 = vpop.f32.mrf.mxu0
    %868 = vdwg.mxu0
    %869 = vmatprep.subr.mxu0 0.0
    %870 = vmatpush1.msra.mxu0 0.0
    %871 = vmatprep.subr.mxu0 0.0
    %872 = vmatpush1.msra.mxu0 0.0
    %873 = vmatprep.subr.mxu0 0.0
    %874 = vmatpush1.msra.mxu0 0.0
    %875 = vmatprep.subr.mxu0 0.0
    %876 = vmatpush1.msra.mxu0 0.0
    %877 = vmatprep.subr.mxu0 0.0
    %878 = vmatpush1.msra.mxu0 0.0
    %879 = vmatprep.subr.mxu0 0.0
    %880 = vmatpush1.msra.mxu0 0.0
    %881 = vmatprep.subr.mxu0 0.0
    %882 = vmatpush1.msra.mxu0 0.0
    %883 = vmatprep.subr.mxu0 0.0
    %884 = vmatpush1.msra.mxu0 0.0
    %885 = vmatprep.subr.mxu0 0.0
    %v886 = vand.u32 %v575, 4294901760
    %887 = vmatpush1.msra.mxu0 %v886
    %888 = vmatprep.subr.mxu0 0.0
    %v889 = vand.u32 %v574, 4294901760
    %890 = vmatpush1.msra.mxu0 %v889
    %891 = vmatprep.subr.mxu0 0.0
    %v892 = vand.u32 %v573, 4294901760
    %893 = vmatpush1.msra.mxu0 %v892
    %894 = vmatprep.subr.mxu0 0.0
    %v895 = vand.u32 %v572, 4294901760
    %896 = vmatpush1.msra.mxu0 %v895
    %897 = vmatprep.subr.mxu0 0.0
    %v898 = vand.u32 %v571, 4294901760
    %899 = vmatpush1.msra.mxu0 %v898
    %900 = vmatprep.subr.mxu0 0.0
    %v901 = vand.u32 %v570, 4294901760
    %902 = vmatpush1.msra.mxu0 %v901
    %903 = vmatprep.subr.mxu0 0.0
    %v904 = vand.u32 %v569, 4294901760
    %905 = vmatpush1.msra.mxu0 %v904
    %906 = vmatprep.subr.mxu0 0.0
    %v907 = vand.u32 %v568, 4294901760
    %908 = vmatpush1.msra.mxu0 %v907
    %909 = vmatprep.subr.mxu0 0.0
    %910 = vmatpush2.msra.mxu0 0.0
    %911 = vmatprep.subr.mxu0 0.0
    %912 = vmatpush2.msra.mxu0 0.0
    %913 = vmatprep.subr.mxu0 0.0
    %914 = vmatpush2.msra.mxu0 0.0
    %915 = vmatprep.subr.mxu0 0.0
    %916 = vmatpush2.msra.mxu0 0.0
    %917 = vmatprep.subr.mxu0 0.0
    %918 = vmatpush2.msra.mxu0 0.0
    %919 = vmatprep.subr.mxu0 0.0
    %920 = vmatpush2.msra.mxu0 0.0
    %921 = vmatprep.subr.mxu0 0.0
    %922 = vmatpush2.msra.mxu0 0.0
    %923 = vmatprep.subr.mxu0 0.0
    %924 = vmatpush2.msra.mxu0 0.0
    %925 = vmatprep.subr.mxu0 0.0
    %926 = vmatpush2.msra.mxu0 0.0
    %927 = vmatprep.subr.mxu0 0.0
    %928 = vmatpush2.msra.mxu0 0.0
    %929 = vmatprep.subr.mxu0 0.0
    %930 = vmatpush2.msra.mxu0 0.0
    %931 = vmatprep.subr.mxu0 0.0
    %932 = vmatpush2.msra.mxu0 0.0
    %933 = vmatprep.subr.mxu0 0.0
    %934 = vmatpush2.msra.mxu0 0.0
    %935 = vmatprep.subr.mxu0 0.0
    %936 = vmatpush2.msra.mxu0 0.0
    %937 = vmatprep.subr.mxu0 0.0
    %938 = vmatpush2.msra.mxu0 0.0
    %939 = vmatprep.subr.mxu0 0.0
    %940 = vmatpush2.msra.mxu0 0.0
    %941 = vmatprep.mubr.f32.mxu0 0.0
    %v942 = vand.u32 %v585, 4294901760
    %v943 = vsub.f32 %v585, %v942
    %v944 = vand.u32 %v943, 4294901760
    %945 = vmatmul.mubr.f32.gmra.mxu0 %v944
    %v946 = vpop.f32.mrf.mxu0
    %v947 = vadd.f32 %v866, %v946
    %v948 = vpop.f32.mrf.mxu0
    %949 = vdwg.mxu0
    %950 = vmatprep.subr.mxu0 0.0
    %951 = vmatpush1.msra.mxu0 0.0
    %952 = vmatprep.subr.mxu0 0.0
    %953 = vmatpush1.msra.mxu0 0.0
    %954 = vmatprep.subr.mxu0 0.0
    %955 = vmatpush1.msra.mxu0 0.0
    %956 = vmatprep.subr.mxu0 0.0
    %957 = vmatpush1.msra.mxu0 0.0
    %958 = vmatprep.subr.mxu0 0.0
    %959 = vmatpush1.msra.mxu0 0.0
    %960 = vmatprep.subr.mxu0 0.0
    %961 = vmatpush1.msra.mxu0 0.0
    %962 = vmatprep.subr.mxu0 0.0
    %963 = vmatpush1.msra.mxu0 0.0
    %964 = vmatprep.subr.mxu0 0.0
    %965 = vmatpush1.msra.mxu0 0.0
    %966 = vmatprep.subr.mxu0 0.0
    %v967 = vand.u32 %v575, 4294901760
    %v968 = vsub.f32 %v575, %v967
    %v969 = vand.u32 %v968, 4294901760
    %970 = vmatpush1.msra.mxu0 %v969
    %971 = vmatprep.subr.mxu0 0.0
    %v972 = vand.u32 %v574, 4294901760
    %v973 = vsub.f32 %v574, %v972
    %v974 = vand.u32 %v973, 4294901760
    %975 = vmatpush1.msra.mxu0 %v974
    %976 = vmatprep.subr.mxu0 0.0
    %v977 = vand.u32 %v573, 4294901760
    %v978 = vsub.f32 %v573, %v977
    %v979 = vand.u32 %v978, 4294901760
    %980 = vmatpush1.msra.mxu0 %v979
    %981 = vmatprep.subr.mxu0 0.0
    %v982 = vand.u32 %v572, 4294901760
    %v983 = vsub.f32 %v572, %v982
    %v984 = vand.u32 %v983, 4294901760
    %985 = vmatpush1.msra.mxu0 %v984
    %986 = vmatprep.subr.mxu0 0.0
    %v987 = vand.u32 %v571, 4294901760
    %v988 = vsub.f32 %v571, %v987
    %v989 = vand.u32 %v988, 4294901760
    %990 = vmatpush1.msra.mxu0 %v989
    %991 = vmatprep.subr.mxu0 0.0
    %v992 = vand.u32 %v570, 4294901760
    %v993 = vsub.f32 %v570, %v992
    %v994 = vand.u32 %v993, 4294901760
    %995 = vmatpush1.msra.mxu0 %v994
    %996 = vmatprep.subr.mxu0 0.0
    %v997 = vand.u32 %v569, 4294901760
    %v998 = vsub.f32 %v569, %v997
    %v999 = vand.u32 %v998, 4294901760
    %1000 = vmatpush1.msra.mxu0 %v999
    %1001 = vmatprep.subr.mxu0 0.0
    %v1002 = vand.u32 %v568, 4294901760
    %v1003 = vsub.f32 %v568, %v1002
    %v1004 = vand.u32 %v1003, 4294901760
    %1005 = vmatpush1.msra.mxu0 %v1004
    %1006 = vmatprep.subr.mxu0 0.0
    %1007 = vmatpush2.msra.mxu0 0.0
    %1008 = vmatprep.subr.mxu0 0.0
    %1009 = vmatpush2.msra.mxu0 0.0
    %1010 = vmatprep.subr.mxu0 0.0
    %1011 = vmatpush2.msra.mxu0 0.0
    %1012 = vmatprep.subr.mxu0 0.0
    %1013 = vmatpush2.msra.mxu0 0.0
    %1014 = vmatprep.subr.mxu0 0.0
    %1015 = vmatpush2.msra.mxu0 0.0
    %1016 = vmatprep.subr.mxu0 0.0
    %1017 = vmatpush2.msra.mxu0 0.0
    %1018 = vmatprep.subr.mxu0 0.0
    %1019 = vmatpush2.msra.mxu0 0.0
    %1020 = vmatprep.subr.mxu0 0.0
    %1021 = vmatpush2.msra.mxu0 0.0
    %1022 = vmatprep.subr.mxu0 0.0
    %1023 = vmatpush2.msra.mxu0 0.0
    %1024 = vmatprep.subr.mxu0 0.0
    %1025 = vmatpush2.msra.mxu0 0.0
    %1026 = vmatprep.subr.mxu0 0.0
    %1027 = vmatpush2.msra.mxu0 0.0
    %1028 = vmatprep.subr.mxu0 0.0
    %1029 = vmatpush2.msra.mxu0 0.0
    %1030 = vmatprep.subr.mxu0 0.0
    %1031 = vmatpush2.msra.mxu0 0.0
    %1032 = vmatprep.subr.mxu0 0.0
    %1033 = vmatpush2.msra.mxu0 0.0
    %1034 = vmatprep.subr.mxu0 0.0
    %1035 = vmatpush2.msra.mxu0 0.0
    %1036 = vmatprep.subr.mxu0 0.0
    %1037 = vmatpush2.msra.mxu0 0.0
    %1038 = vmatprep.mubr.f32.mxu0 0.0
    %v1039 = vand.u32 %v585, 4294901760
    %1040 = vmatmul.mubr.f32.gmra.mxu0 %v1039
    %v1041 = vpop.f32.mrf.mxu0
    %v1042 = vadd.f32 %v947, %v1041
    %v1043 = vpop.f32.mrf.mxu0
    %1044 = vdwg.mxu0
    %1045 = vmatprep.subr.mxu0 0.0
    %1046 = vmatpush1.msra.mxu0 0.0
    %1047 = vmatprep.subr.mxu0 0.0
    %1048 = vmatpush1.msra.mxu0 0.0
    %1049 = vmatprep.subr.mxu0 0.0
    %1050 = vmatpush1.msra.mxu0 0.0
    %1051 = vmatprep.subr.mxu0 0.0
    %1052 = vmatpush1.msra.mxu0 0.0
    %1053 = vmatprep.subr.mxu0 0.0
    %1054 = vmatpush1.msra.mxu0 0.0
    %1055 = vmatprep.subr.mxu0 0.0
    %1056 = vmatpush1.msra.mxu0 0.0
    %1057 = vmatprep.subr.mxu0 0.0
    %1058 = vmatpush1.msra.mxu0 0.0
    %1059 = vmatprep.subr.mxu0 0.0
    %1060 = vmatpush1.msra.mxu0 0.0
    %1061 = vmatprep.subr.mxu0 0.0
    %v1062 = vand.u32 %v575, 4294901760
    %1063 = vmatpush1.msra.mxu0 %v1062
    %1064 = vmatprep.subr.mxu0 0.0
    %v1065 = vand.u32 %v574, 4294901760
    %1066 = vmatpush1.msra.mxu0 %v1065
    %1067 = vmatprep.subr.mxu0 0.0
    %v1068 = vand.u32 %v573, 4294901760
    %1069 = vmatpush1.msra.mxu0 %v1068
    %1070 = vmatprep.subr.mxu0 0.0
    %v1071 = vand.u32 %v572, 4294901760
    %1072 = vmatpush1.msra.mxu0 %v1071
    %1073 = vmatprep.subr.mxu0 0.0
    %v1074 = vand.u32 %v571, 4294901760
    %1075 = vmatpush1.msra.mxu0 %v1074
    %1076 = vmatprep.subr.mxu0 0.0
    %v1077 = vand.u32 %v570, 4294901760
    %1078 = vmatpush1.msra.mxu0 %v1077
    %1079 = vmatprep.subr.mxu0 0.0
    %v1080 = vand.u32 %v569, 4294901760
    %1081 = vmatpush1.msra.mxu0 %v1080
    %1082 = vmatprep.subr.mxu0 0.0
    %v1083 = vand.u32 %v568, 4294901760
    %1084 = vmatpush1.msra.mxu0 %v1083
    %1085 = vmatprep.subr.mxu0 0.0
    %1086 = vmatpush2.msra.mxu0 0.0
    %1087 = vmatprep.subr.mxu0 0.0
    %1088 = vmatpush2.msra.mxu0 0.0
    %1089 = vmatprep.subr.mxu0 0.0
    %1090 = vmatpush2.msra.mxu0 0.0
    %1091 = vmatprep.subr.mxu0 0.0
    %1092 = vmatpush2.msra.mxu0 0.0
    %1093 = vmatprep.subr.mxu0 0.0
    %1094 = vmatpush2.msra.mxu0 0.0
    %1095 = vmatprep.subr.mxu0 0.0
    %1096 = vmatpush2.msra.mxu0 0.0
    %1097 = vmatprep.subr.mxu0 0.0
    %1098 = vmatpush2.msra.mxu0 0.0
    %1099 = vmatprep.subr.mxu0 0.0
    %1100 = vmatpush2.msra.mxu0 0.0
    %1101 = vmatprep.subr.mxu0 0.0
    %1102 = vmatpush2.msra.mxu0 0.0
    %1103 = vmatprep.subr.mxu0 0.0
    %1104 = vmatpush2.msra.mxu0 0.0
    %1105 = vmatprep.subr.mxu0 0.0
    %1106 = vmatpush2.msra.mxu0 0.0
    %1107 = vmatprep.subr.mxu0 0.0
    %1108 = vmatpush2.msra.mxu0 0.0
    %1109 = vmatprep.subr.mxu0 0.0
    %1110 = vmatpush2.msra.mxu0 0.0
    %1111 = vmatprep.subr.mxu0 0.0
    %1112 = vmatpush2.msra.mxu0 0.0
    %1113 = vmatprep.subr.mxu0 0.0
    %1114 = vmatpush2.msra.mxu0 0.0
    %1115 = vmatprep.subr.mxu0 0.0
    %1116 = vmatpush2.msra.mxu0 0.0
    %1117 = vmatprep.mubr.f32.mxu0 0.0
    %v1118 = vand.u32 %v585, 4294901760
    %1119 = vmatmul.mubr.f32.gmra.mxu0 %v1118
    %v1120 = vpop.f32.mrf.mxu0
    %v1121 = vadd.f32 %v1042, %v1120
    %v1122 = vpop.f32.mrf.mxu0
    %1123 = vdwg.mxu0
    %vm1124 = vcmask 517120
    %1125 = vst.msk [vmem:[#allocation8] sm:$0x3] %vm1124, %v1121
    // Predicated region
    $region34: #{tpu_custom_call.1} parent=1 // pred_check
      _
    $region35: #{tpu_custom_call.1} parent=1 // pred_check_branch
      %1127 = sbr.rel (0) target = $region37
    $region36: #{tpu_custom_call.1} parent=1 // pred_region
      %s1129 = ssub.s32 32, 32
      %1130 = vsyncadd [#allocation4], %s1129
      %s1132 = sshll.u32 [#allocation8], 4
      %s1133 = int_to_ptr.vmem [resolvable:$true] %s1132
      %1135 = dma.vmem_to_hbm [thread:$0]  %s1133, 32, %s5, [#allocation4]
    $region37: #{tpu_custom_call.1} parent=1 // pred_fallthru
      _
    // Predicated region
    $region38: #{tpu_custom_call.1} parent=1 // pred_check
      _
    $region39: #{tpu_custom_call.1} parent=1 // pred_check_branch
      %1137 = sbr.rel (0) target = $region41
    $region40: #{tpu_custom_call.1} parent=1 // pred_region
      %1138 = dma.done [#allocation4], 32
    $region41: #{tpu_custom_call.1} parent=1 // pred_fallthru
      _
    %1139 = vsyncpa [#allocation3], 1
    %1140 = vsyncpa [#allocation6], 1
    %1141 = vsyncpa [#allocation4], 1

</llo_original>
